<compile_context>
chip_gen: v6e
topology: v6e:2x2x1
jax: 0.10.0
libtpu: 0.0.40
codegen_flags: <defaults>
</compile_context>

<pallas_src>
import functools

import jax
import jax.numpy as jnp
from jax import lax
from jax.experimental import pallas as pl
from jax.experimental.pallas import tpu as pltpu


def _round_up(x: int, m: int) -> int:
    return ((x + m - 1) // m) * m


# --------------------------- kernels ---------------------------------------

def _linear_relu_kernel_acc(x_ref, w_ref, b_ref, o_ref, acc_ref):
    """Non-f32 output: f32 VMEM accumulator, single downcast at finalize."""
    k = pl.program_id(2)

    @pl.when(k == 0)
    def _():
        acc_ref[...] = jnp.zeros_like(acc_ref)

    # x tile (tm, tk) contracted with w tile (tn, tk) on w's LAST dim:
    # transposed RHS goes straight to the MXU (no per-step transpose).
    acc_ref[...] += lax.dot_general(
        x_ref[...], w_ref[...],
        dimension_numbers=(((1,), (1,)), ((), ())),
        preferred_element_type=jnp.float32,
    )

    @pl.when(k == pl.num_programs(2) - 1)
    def _():
        y = acc_ref[...] + b_ref[...]                 # (tm, tn) + (1, tn)
        o_ref[...] = jnp.maximum(y, 0.0).astype(o_ref.dtype)


def _linear_relu_kernel_f32(x_ref, w_ref, b_ref, o_ref):
    """f32 output: accumulate directly into the resident output block."""
    k = pl.program_id(2)

    @pl.when(k == 0)
    def _():
        o_ref[...] = jnp.zeros_like(o_ref)

    o_ref[...] += lax.dot_general(
        x_ref[...], w_ref[...],
        dimension_numbers=(((1,), (1,)), ((), ())),
        preferred_element_type=jnp.float32,
    )

    @pl.when(k == pl.num_programs(2) - 1)
    def _():
        o_ref[...] = jnp.maximum(o_ref[...] + b_ref[...], 0.0)


def _linear_relu_pallas(x_p, w_p, b_p, *, tm, tn, tk, out_dtype):
    """Padded inputs -> padded relu(x @ w.T + b). All dims divide the tiles."""
    B_p, K_p = x_p.shape
    N_p, _ = w_p.shape
    grid = (B_p // tm, N_p // tn, K_p // tk)

    f32_out = jnp.dtype(out_dtype) == jnp.dtype(jnp.float32)
    kernel = _linear_relu_kernel_f32 if f32_out else _linear_relu_kernel_acc
    scratch = [] if f32_out else [pltpu.VMEM((tm, tn), jnp.float32)]

    # VMEM budget: double-buffered inputs/outputs + scratch. Only raise the
    # scoped limit past the most restrictive default (v5e: 16 MiB), capped to
    # stay well under v7x's 64 MiB physical per TensorCore.
    est = (2 * (tm * tk * x_p.dtype.itemsize
                + tn * tk * w_p.dtype.itemsize
                + tn * b_p.dtype.itemsize)
           + 2 * tm * tn * jnp.dtype(out_dtype).itemsize
           + (0 if f32_out else tm * tn * 4))
    vmem_limit = None
    if est > 16 * 1024 * 1024:
        vmem_limit = min(int(est * 1.5), 60 * 1024 * 1024)

    return pl.pallas_call(
        kernel,
        out_shape=jax.ShapeDtypeStruct((B_p, N_p), out_dtype),
        grid=grid,
        in_specs=[
            pl.BlockSpec((tm, tk), lambda i, j, k: (i, k)),   # x
            pl.BlockSpec((tn, tk), lambda i, j, k: (j, k)),   # weight (out, in)
            pl.BlockSpec((1, tn), lambda i, j, k: (0, j)),    # bias
        ],
        out_specs=pl.BlockSpec((tm, tn), lambda i, j, k: (i, j)),
        scratch_shapes=scratch,
        compiler_params=pltpu.CompilerParams(
            dimension_semantics=("parallel", "parallel", "arbitrary"),
            vmem_limit_bytes=vmem_limit,
        ),
    )(x_p, w_p, b_p)


def _pallas_forward(x, w_p, b_p, *, tm_max, tn, tk, K_p, out_f, sub,
                    compute_dtype):
    B, in_f = x.shape
    out_dtype = x.dtype

    # Fewest M tiles <= tm_max, rounded up to the sublane packing, to minimize
    # batch padding waste while keeping the (8,128) block constraint.
    n_m = -(-B // tm_max)
    tm = _round_up(-(-B // n_m), sub)
    B_p = _round_up(B, tm)

    x_p = x.astype(compute_dtype)
    if (B_p, K_p) != (B, in_f):
        # Explicit zero padding of the K edge — never read unpadded garbage.
        x_p = jnp.pad(x_p, ((0, B_p - B), (0, K_p - in_f)))

    out_p = _linear_relu_pallas(x_p, w_p, b_p, tm=tm, tn=tn, tk=tk,
                                out_dtype=out_dtype)
    N_p = w_p.shape[0]
    if (B_p, N_p) != (B, out_f):
        out_p = out_p[:B, :out_f]
    return out_p


def _xla_forward(x, weight, bias):
    return jnp.maximum(x @ weight.T + bias, 0.0)


# --------------------------- module wrapper ---------------------------------

class SingleNeuronPallas:
    """y = relu(x @ weight.T + bias), PyTorch nn.Linear parameter layout.

    Weight/bias cast+pad happens once here (not per forward call). Tiny
    problems fall back to fused XLA unless `prefer_pallas=True`.
    """

    def __init__(self, weight, bias, *, compute_dtype=jnp.bfloat16,
                 tm=512, tn=512, tk=1024, batch_hint=None, prefer_pallas=None):
        out_f, in_f = weight.shape
        assert bias.shape == (out_f,), "bias/out_features mismatch"
        self.out_f, self.in_f = out_f, in_f
        self.compute_dtype = jnp.dtype(compute_dtype)
        self.prefer_pallas = prefer_pallas

        # Sublane packing of the compute dtype (bf16 packs 16 rows per vreg).
        self._sub = 16 if self.compute_dtype == jnp.dtype(jnp.bfloat16) else 8

        # ---- tile choice (N/K fixed at init; M chosen per call) ----
        tn = min(tn, _round_up(out_f, 128))
        tk = min(tk, _round_up(in_f, 128))
        # v7x megacore: if the whole batch fits one M tile, keep the second
        # TensorCore busy by splitting N into >= 2 parallel tiles.
        if (batch_hint is not None
                and _round_up(batch_hint, self._sub) <= tm
                and _round_up(out_f, 128) >= 2 * 128
                and _round_up(out_f, tn) // tn < 2):
            tn = max(128, ((_round_up(out_f, 128) // 2) // 128) * 128)
        self.tm_max, self.tn, self.tk = tm, tn, tk

        self.N_p = _round_up(out_f, tn)
        self.K_p = _round_up(in_f, tk)

        # ---- one-time parameter prep (cast + zero pad) ----
        w_p = weight.astype(self.compute_dtype)
        if (self.N_p, self.K_p) != (out_f, in_f):
            w_p = jnp.pad(w_p, ((0, self.N_p - out_f), (0, self.K_p - in_f)))
        b_p = bias.astype(jnp.float32).reshape(1, out_f)
        if self.N_p != out_f:
            b_p = jnp.pad(b_p, ((0, 0), (0, self.N_p - out_f)))
        self.w_p = jax.device_put(w_p)
        self.b_p = jax.device_put(b_p)
        self.weight = weight          # originals kept for the XLA fallback
        self.bias = bias

        self._fwd_pallas = jax.jit(functools.partial(
            _pallas_forward, tm_max=self.tm_max, tn=self.tn, tk=self.tk,
            K_p=self.K_p, out_f=self.out_f, sub=self._sub,
            compute_dtype=self.compute_dtype))
        self._fwd_xla = jax.jit(_xla_forward)

    def __call__(self, x):
        use_pallas = self.prefer_pallas
        if use_pallas is None:
            # Gate: fused XLA wins when pallas_call fixed cost dominates.
            use_pallas = (x.shape[0] * self.out_f * self.in_f) >= (1 << 20)
        if use_pallas:
            return self._fwd_pallas(x, self.w_p, self.b_p)
        return self._fwd_xla(x, self.weight, self.bias)


# ------------------------------ test ----------------------------------------

if __name__ == "__main__":
    def _max_rel_err(y, y_ref):
        return float(jnp.max(jnp.abs(y - y_ref)) / (jnp.max(jnp.abs(y_ref)) + 1e-6))

    # Small shapes consistent with the module: batch=8, input=32, output=16.
    B, IN, OUT = 8, 32, 16
    key = jax.random.PRNGKey(0)
    kx, kw, kb = jax.random.split(key, 3)
    x = jax.random.normal(kx, (B, IN), dtype=jnp.float32)
    bound = 1.0 / jnp.sqrt(jnp.float32(IN))
    weight = jax.random.uniform(kw, (OUT, IN), minval=-bound, maxval=bound,
                                dtype=jnp.float32)
    bias = jax.random.uniform(kb, (OUT,), minval=-bound, maxval=bound,
                              dtype=jnp.float32)

    neuron = SingleNeuronPallas(weight, bias, batch_hint=B, prefer_pallas=True)
    y = jax.block_until_ready(neuron(x))
    y_ref = _xla_forward(x, weight, bias)
    assert y.shape == (B, OUT)
    assert _max_rel_err(y, y_ref) < 3e-2, "small-shape mismatch"

    # Larger, deliberately unaligned shapes: exercises multi-tile grid
    # (M=1, N=2, K=3), K-axis accumulation, and edge padding.
    B2, IN2, OUT2 = 192, 2304, 640
    k1, k2, k3 = jax.random.split(jax.random.PRNGKey(1), 3)
    x2 = jax.random.normal(k1, (B2, IN2), dtype=jnp.float32)
    bound2 = 1.0 / jnp.sqrt(jnp.float32(IN2))
    w2 = jax.random.uniform(k2, (OUT2, IN2), minval=-bound2, maxval=bound2,
                            dtype=jnp.float32)
    b2 = jax.random.uniform(k3, (OUT2,), minval=-bound2, maxval=bound2,
                            dtype=jnp.float32)
    neuron2 = SingleNeuronPallas(w2, b2, batch_hint=B2, prefer_pallas=True)
    y2 = jax.block_until_ready(neuron2(x2))
    y2_ref = _xla_forward(x2, w2, b2)
    assert y2.shape == (B2, OUT2)
    assert _max_rel_err(y2, y2_ref) < 3e-2, "large-shape mismatch"

    print("KERNEL_OK")
</pallas_src>

<mosaic_0001>
module attributes {stable_mosaic.version = 11 : i64} {
  func.func @_linear_relu_kernel_f32(%arg0: i32, %arg1: i32, %arg2: i32, %arg3: memref<16x128xbf16, #tpu.memory_space<vmem>>, %arg4: memref<128x128xbf16, #tpu.memory_space<vmem>>, %arg5: memref<1x128xf32, #tpu.memory_space<vmem>>, %arg6: memref<16x128xf32, #tpu.memory_space<vmem>>) attributes {dimension_semantics = [#tpu.dimension_semantics<parallel>, #tpu.dimension_semantics<parallel>, #tpu.dimension_semantics<arbitrary>], iteration_bounds = array<i64: 1, 1, 1>, scalar_prefetch = 0 : i64, scratch_operands = 0 : i64, tpu.core_type = #tpu.core_type<tc>, window_params = [{transform_indices = @transform_0, window_bounds = array<i64: 16, 128>}, {transform_indices = @transform_1, window_bounds = array<i64: 128, 128>}, {transform_indices = @transform_2, window_bounds = array<i64: 1, 128>}, {transform_indices = @transform_3, window_bounds = array<i64: 16, 128>}]} {
    %c0_i32 = arith.constant 0 : i32
    %0 = arith.cmpi eq, %arg2, %c0_i32 : i32
    %1 = arith.extui %0 : i1 to i32
    %c0_i32_0 = arith.constant 0 : i32
    %2 = arith.cmpi ne, %1, %c0_i32_0 : i32
    scf.if %2 {
      %cst_10 = arith.constant 0.000000e+00 : f32
      %12 = vector.broadcast %cst_10 : f32 to vector<16x128xf32>
      %c0_11 = arith.constant 0 : index
      %c0_12 = arith.constant 0 : index
      %13 = vector.load %arg6[%c0_11, %c0_12] : memref<16x128xf32, #tpu.memory_space<vmem>>, vector<16x128xf32>
      tpu.vector_store %arg6[%c0_11, %c0_12], %12 {strides = array<i32>} : memref<16x128xf32, #tpu.memory_space<vmem>>, vector<16x128xf32>,
    } else {
    }
    %c0 = arith.constant 0 : index
    %c0_1 = arith.constant 0 : index
    %3 = vector.load %arg6[%c0, %c0_1] : memref<16x128xf32, #tpu.memory_space<vmem>>, vector<16x128xf32>
    %c0_2 = arith.constant 0 : index
    %c0_3 = arith.constant 0 : index
    %4 = vector.load %arg3[%c0_2, %c0_3] : memref<16x128xbf16, #tpu.memory_space<vmem>>, vector<16x128xbf16>
    %c0_4 = arith.constant 0 : index
    %c0_5 = arith.constant 0 : index
    %5 = vector.load %arg4[%c0_4, %c0_5] : memref<128x128xbf16, #tpu.memory_space<vmem>>, vector<128x128xbf16>
    %cst = arith.constant dense<0.000000e+00> : vector<16x128xf32>
    %6 = tpu.matmul %4, %5, %cst {dimension_numbers = #tpu.dot_dimension_numbers<[1], [1], [0], [0], [0, 0, 1, 0], [], []>} : vector<16x128xbf16>, vector<128x128xbf16>, vector<16x128xf32> -> vector<16x128xf32>
    %7 = arith.addf %3, %6 : vector<16x128xf32>
    %c0_6 = arith.constant 0 : index
    %c0_7 = arith.constant 0 : index
    %8 = vector.load %arg6[%c0_6, %c0_7] : memref<16x128xf32, #tpu.memory_space<vmem>>, vector<16x128xf32>
    tpu.vector_store %arg6[%c0_6, %c0_7], %7 {strides = array<i32>} : memref<16x128xf32, #tpu.memory_space<vmem>>, vector<16x128xf32>,
    %c0_i32_8 = arith.constant 0 : i32
    %9 = arith.cmpi eq, %arg2, %c0_i32_8 : i32
    %10 = arith.extui %9 : i1 to i32
    %c0_i32_9 = arith.constant 0 : i32
    %11 = arith.cmpi ne, %10, %c0_i32_9 : i32
    scf.if %11 {
      %c0_10 = arith.constant 0 : index
      %c0_11 = arith.constant 0 : index
      %12 = vector.load %arg6[%c0_10, %c0_11] : memref<16x128xf32, #tpu.memory_space<vmem>>, vector<16x128xf32>
      %c0_12 = arith.constant 0 : index
      %c0_13 = arith.constant 0 : index
      %13 = vector.load %arg5[%c0_12, %c0_13] : memref<1x128xf32, #tpu.memory_space<vmem>>, vector<1x128xf32>
      %14 = vector.broadcast %13 : vector<1x128xf32> to vector<16x128xf32>
      %15 = arith.addf %12, %14 : vector<16x128xf32>
      %cst_14 = arith.constant 0.000000e+00 : f32
      %16 = vector.broadcast %cst_14 : f32 to vector<16x128xf32>
      %17 = arith.maximumf %15, %16 : vector<16x128xf32>
      %c0_15 = arith.constant 0 : index
      %c0_16 = arith.constant 0 : index
      %18 = vector.load %arg6[%c0_15, %c0_16] : memref<16x128xf32, #tpu.memory_space<vmem>>, vector<16x128xf32>
      tpu.vector_store %arg6[%c0_15, %c0_16], %17 {strides = array<i32>} : memref<16x128xf32, #tpu.memory_space<vmem>>, vector<16x128xf32>,
    } else {
    }
    return
  }
  func.func @transform_0(%arg0: i32, %arg1: i32, %arg2: i32) -> (i32, i32) {
    %c0_i32 = arith.constant 0 : i32
    return %arg0, %arg2 : i32, i32
  }
  func.func @transform_1(%arg0: i32, %arg1: i32, %arg2: i32) -> (i32, i32) {
    %c0_i32 = arith.constant 0 : i32
    return %arg1, %arg2 : i32, i32
  }
  func.func @transform_2(%arg0: i32, %arg1: i32, %arg2: i32) -> (i32, i32) {
    %c0_i32 = arith.constant 0 : i32
    %c0_i32_0 = arith.constant 0 : i32
    return %c0_i32, %arg1 : i32, i32
  }
  func.func @transform_3(%arg0: i32, %arg1: i32, %arg2: i32) -> (i32, i32) {
    %c0_i32 = arith.constant 0 : i32
    return %arg0, %arg1 : i32, i32
  }
}

</mosaic_0001>

<llo_original>
// kernel: _pallas_forward.1
$region0: #{_pallas_forward.1}
  #allocation0 [shape = 'u32[]', space=smem, size = 0x4, offset = 0x4, fixed_abs, tag = 'smem constant byte address 0x4 - core index']
  #allocation1 [shape = 'u32[144,128]{1,0:T(1,128)}', space=vmem, size = 0x12000, scoped, tag = 'internal scratch']
  %s0 = inlined_call_operand.vmem [shape: bf16[16,128], index: 0, kind: input, shape index: {}]
  %s1 = inlined_call_operand.hbm [shape: bf16[128,128], index: 1, kind: input, shape index: {}]
  %s2 = inlined_call_operand.vmem [shape: f32[1,128], index: 2, kind: input, shape index: {}]
  %s3 = inlined_call_operand.vmem [shape: f32[16,128], index: 3, kind: output, shape index: {}]
  %s4 = sld [smem:[#allocation0]]
  $region34: #{_pallas_forward.1} parent=0
    _
  %s6 = ssub.s32 1, %s4
  %s7 = scalar_select 0, %s6, %s4
  $region1: #{_pallas_forward.1} parent=0
    #allocation2 [shape = 'u8[32768]{0}', space=vmem, size = 0x8000, scoped, tag = 'input window, operand 1, single buffered']
    #allocation3 [shape = 's32[1]{0}', space=sflag, size = 0x4, scoped, tag = 'scoped memory for _pallas_forward.1']
    %8 = vsyncpa [#allocation3], 0
    // Predicated region
    $region2: #{_pallas_forward.1} parent=1 // pred_check
      _
    $region3: #{_pallas_forward.1} parent=1 // pred_check_branch
      %10 = sbr.rel (0) target = $region5
    $region4: #{_pallas_forward.1} parent=1 // pred_region
      _
    $region5: #{_pallas_forward.1} parent=1 // pred_fallthru
      _
    // Predicated region
    $region6: #{_pallas_forward.1} parent=1 // pred_check
      _
    $region7: #{_pallas_forward.1} parent=1 // pred_check_branch
      %12 = sbr.rel (0) target = $region9
    $region8: #{_pallas_forward.1} parent=1 // pred_region
      %s14 = ssub.s32 1024, 1024
      %15 = vsyncadd [#allocation3], %s14
      %s16 = sshll.u32 [#allocation2], 4
      %s17 = int_to_ptr.vmem [resolvable:$true] %s16
      %22 = dma.hbm_to_vmem [thread:$0]  %s1, 1024, %s17, [#allocation3], 64, 64, 4
    $region9: #{_pallas_forward.1} parent=1 // pred_fallthru
      _
    // Predicated region
    $region10: #{_pallas_forward.1} parent=1 // pred_check
      _
    $region11: #{_pallas_forward.1} parent=1 // pred_check_branch
      %24 = sbr.rel (0) target = $region13
    $region12: #{_pallas_forward.1} parent=1 // pred_region
      _
    $region13: #{_pallas_forward.1} parent=1 // pred_fallthru
      _
    // Predicated region
    $region14: #{_pallas_forward.1} parent=1 // pred_check
      _
    $region15: #{_pallas_forward.1} parent=1 // pred_check_branch
      %26 = sbr.rel (0) target = $region17
    $region16: #{_pallas_forward.1} parent=1 // pred_region
      %27 = dma.done [#allocation3], 1024
    $region17: #{_pallas_forward.1} parent=1 // pred_fallthru
      _
    %p29 = scmp.eq.s32.totalorder 0, 0
    // Predicated region
    $region18: #{_pallas_forward.1} parent=1 // pred_check
      %p30 = pneg %p29
    $region19: #{_pallas_forward.1} parent=1 // pred_check_branch
      %32 = sbr.rel (%p30) target = $region21
    $region20: #{_pallas_forward.1} parent=1 // pred_region
      %33 = vst [vmem:[%s3] sm:$0xff] 0.0
      %34 = vst [vmem:[%s3 + $0x8] sm:$0xff] 0.0
    $region21: #{_pallas_forward.1} parent=1 // pred_fallthru
      _
    %v35 = vld [vmem:[%s3] sm:$0xff]
    %v36 = vld [vmem:[%s3 + $0x8] sm:$0xff]
    %v37 = vld [vmem:[%s0] sm:$0xf]
    %v38 = vld [vmem:[%s0 + $0x4] sm:$0xf]
    %v39 = vld [vmem:[#allocation2] sm:$0xf]
    %v40 = vld [vmem:[#allocation2 + $0x4] sm:$0xf]
    %v41 = vld [vmem:[#allocation2 + $0x8] sm:$0xf]
    %v42 = vld [vmem:[#allocation2 + $0xc] sm:$0xf]
    %v43 = vld [vmem:[#allocation2 + $0x10] sm:$0xf]
    %v44 = vld [vmem:[#allocation2 + $0x14] sm:$0xf]
    %v45 = vld [vmem:[#allocation2 + $0x18] sm:$0xf]
    %v46 = vld [vmem:[#allocation2 + $0x1c] sm:$0xf]
    %v47 = vld [vmem:[#allocation2 + $0x20] sm:$0xf]
    %v48 = vld [vmem:[#allocation2 + $0x24] sm:$0xf]
    %v49 = vld [vmem:[#allocation2 + $0x28] sm:$0xf]
    %v50 = vld [vmem:[#allocation2 + $0x2c] sm:$0xf]
    %v51 = vld [vmem:[#allocation2 + $0x30] sm:$0xf]
    %v52 = vld [vmem:[#allocation2 + $0x34] sm:$0xf]
    %v53 = vld [vmem:[#allocation2 + $0x38] sm:$0xf]
    %v54 = vld [vmem:[#allocation2 + $0x3c] sm:$0xf]
    %v57 = vunpack.c.l.b16 %v37
    %v58 = vunpack.c.l.b16 %v38
    %v59 = vpack.c.b16 %v58, %v57
    %v77 = vunpack.c.l.b16 %v39
    %v78 = vunpack.c.l.b16 %v40
    %v79 = vunpack.c.l.b16 %v41
    %v80 = vunpack.c.l.b16 %v42
    %v81 = vunpack.c.l.b16 %v43
    %v82 = vunpack.c.l.b16 %v44
    %v83 = vunpack.c.l.b16 %v45
    %v84 = vunpack.c.l.b16 %v46
    %v85 = vunpack.c.l.b16 %v47
    %v86 = vunpack.c.l.b16 %v48
    %v87 = vunpack.c.l.b16 %v49
    %v88 = vunpack.c.l.b16 %v50
    %v89 = vunpack.c.l.b16 %v51
    %v90 = vunpack.c.l.b16 %v52
    %v91 = vunpack.c.l.b16 %v53
    %v92 = vunpack.c.l.b16 %v54
    %v93 = vpack.c.b16 %v78, %v77
    %v94 = vpack.c.b16 %v80, %v79
    %v95 = vpack.c.b16 %v82, %v81
    %v96 = vpack.c.b16 %v84, %v83
    %v97 = vpack.c.b16 %v86, %v85
    %v98 = vpack.c.b16 %v88, %v87
    %v99 = vpack.c.b16 %v90, %v89
    %v100 = vpack.c.b16 %v92, %v91
    %109 = vmatprep.subr.bf16.mxu0 0
    %110 = vmatpush1.bf16.xpose.msra.mxu0 %v100
    %111 = vmatprep.subr.bf16.mxu0 0
    %112 = vmatpush1.bf16.xpose.msra.mxu0 %v99
    %113 = vmatprep.subr.bf16.mxu0 0
    %114 = vmatpush1.bf16.xpose.msra.mxu0 %v98
    %115 = vmatprep.subr.bf16.mxu0 0
    %116 = vmatpush1.bf16.xpose.msra.mxu0 %v97
    %117 = vmatprep.subr.bf16.mxu0 0
    %118 = vmatpush1.bf16.xpose.msra.mxu0 %v96
    %119 = vmatprep.subr.bf16.mxu0 0
    %120 = vmatpush1.bf16.xpose.msra.mxu0 %v95
    %121 = vmatprep.subr.bf16.mxu0 0
    %122 = vmatpush1.bf16.xpose.msra.mxu0 %v94
    %123 = vmatprep.subr.bf16.mxu0 0
    %124 = vmatpush1.bf16.xpose.msra.mxu0 %v93
    %125 = vmatprep.subr.bf16.mxu0 0
    %126 = vmatpush2.bf16.xpose.msra.mxu0 0
    %127 = vmatprep.subr.bf16.mxu0 0
    %128 = vmatpush2.bf16.xpose.msra.mxu0 0
    %129 = vmatprep.subr.bf16.mxu0 0
    %130 = vmatpush2.bf16.xpose.msra.mxu0 0
    %131 = vmatprep.subr.bf16.mxu0 0
    %132 = vmatpush2.bf16.xpose.msra.mxu0 0
    %133 = vmatprep.subr.bf16.mxu0 0
    %134 = vmatpush2.bf16.xpose.msra.mxu0 0
    %135 = vmatprep.subr.bf16.mxu0 0
    %136 = vmatpush2.bf16.xpose.msra.mxu0 0
    %137 = vmatprep.subr.bf16.mxu0 0
    %138 = vmatpush2.bf16.xpose.msra.mxu0 0
    %139 = vmatprep.subr.bf16.mxu0 0
    %140 = vmatpush2.bf16.xpose.msra.mxu0 0
    %141 = vmatprep.mubr.bf16.mxu0 0
    %142 = vmatmul.mubr.bf16.gmra.mxu0 %v59
    %v143 = vpop.f32.mrf.mxu0
    %v144 = vadd.f32 0.0, %v143
    %v145 = vpop.f32.mrf.mxu0
    %v146 = vpop.f32.mrf.mxu0
    %v147 = vadd.f32 0.0, %v146
    %v148 = vpop.f32.mrf.mxu0
    %149 = vdwg.mxu0
    %v150 = vadd.f32 %v35, %v144
    %v151 = vadd.f32 %v36, %v147
    %152 = vst [vmem:[%s3] sm:$0xff] %v150
    %153 = vst [vmem:[%s3 + $0x8] sm:$0xff] %v151
    // Predicated region
    $region22: #{_pallas_forward.1} parent=1 // pred_check
      %p154 = pneg %p29
    $region23: #{_pallas_forward.1} parent=1 // pred_check_branch
      %156 = sbr.rel (%p154) target = $region25
    $region24: #{_pallas_forward.1} parent=1 // pred_region
      %v157 = vld [vmem:[%s3] sm:$0xff]
      %v158 = vld [vmem:[%s3 + $0x8] sm:$0xff]
      %v159 = vld [vmem:[%s2] sm:$0x1]
      %v161 = vlaneseq
      %v162 = vshrl.u32 %v161, 7
      %v163 = vsub.s32 0, %v162
      %v164 = vrot.slane %v159, %v163
      %v166 = vadd.f32 %v157, %v164
      %v167 = vadd.f32 %v158, %v164
      %v168 = vmax.f32 %v166, 0.0
      %v169 = vmax.f32 %v167, 0.0
      %170 = vst [vmem:[%s3] sm:$0xff] %v168
      %171 = vst [vmem:[%s3 + $0x8] sm:$0xff] %v169
    $region25: #{_pallas_forward.1} parent=1 // pred_fallthru
      _
    // Predicated region
    $region26: #{_pallas_forward.1} parent=1 // pred_check
      _
    $region27: #{_pallas_forward.1} parent=1 // pred_check_branch
      %173 = sbr.rel (0) target = $region29
    $region28: #{_pallas_forward.1} parent=1 // pred_region
      _
    $region29: #{_pallas_forward.1} parent=1 // pred_fallthru
      _
    // Predicated region
    $region30: #{_pallas_forward.1} parent=1 // pred_check
      _
    $region31: #{_pallas_forward.1} parent=1 // pred_check_branch
      %175 = sbr.rel (0) target = $region33
    $region32: #{_pallas_forward.1} parent=1 // pred_region
      _
    $region33: #{_pallas_forward.1} parent=1 // pred_fallthru
      _
    %176 = vsyncpa [#allocation3], 1

</llo_original>
